<compile_context>
chip_gen: v7x
topology: tpu7x:2x2x1
jax: 0.10.0
libtpu: 0.0.40
codegen_flags: <defaults>
</compile_context>

<pallas_src>
from functools import partial
from typing import NamedTuple

import jax
import jax.numpy as jnp
from jax.experimental import pallas as pl
from jax.experimental.pallas import tpu as pltpu


def _round_up(x, m):
    return ((x + m - 1) // m) * m


def _cdiv(a, b):
    return -(-a // b)


def _device_kind():
    try:
        return jax.devices()[0].device_kind.lower()
    except Exception:
        return ""


def _act_dtype():
    # v5e (and older) has no bf16 VPU -> keep PReLU elementwise path in f32 there.
    kind = _device_kind()
    if any(g in kind for g in ("v2", "v3", "v4", "v5")):
        return jnp.float32
    return jnp.bfloat16


def _vmem_budget_bytes():
    # Per-chip VMEM ceiling (v5e/v6e: 128 MiB, v7x: 64 MiB per TC) with headroom.
    try:
        cap = int(pltpu.get_tpu_info().vmem_capacity_bytes)
    except Exception:
        cap = 64 * 1024 * 1024  # conservative fallback (v7x per-TC)
    return int(cap * 0.85)


# ---------------------------------------------------------------------------
# Kernel
# ---------------------------------------------------------------------------
def mlp_kernel(x_ref, w1_ref, b1_ref, a1_ref,
               w2_ref, b2_ref, a2_ref,
               w3_ref, b3_ref, o_ref, *, act_dtype):
    # PReLU single shared alpha per layer: read scalars from SMEM up front.
    a1 = a1_ref[0].astype(act_dtype)
    a2 = a2_ref[0].astype(act_dtype)

    x = x_ref[...]                                             # (TB, in_p) bf16

    # Layer 1: Linear (MXU bf16 x bf16 -> f32 acc) + Dropout(identity) + PReLU.
    h = jnp.dot(x, w1_ref[...], preferred_element_type=jnp.float32) + b1_ref[...]
    h = h.astype(act_dtype)
    h = jnp.where(h > 0, h, a1 * h)

    # Layer 2: Linear + Dropout(identity) + PReLU.
    h = jnp.dot(h.astype(jnp.bfloat16), w2_ref[...],
                preferred_element_type=jnp.float32) + b2_ref[...]
    h = h.astype(act_dtype)
    h = jnp.where(h > 0, h, a2 * h)

    # Layer 3: Linear.
    o = jnp.dot(h.astype(jnp.bfloat16), w3_ref[...],
                preferred_element_type=jnp.float32) + b3_ref[...]
    o_ref[...] = o.astype(o_ref.dtype)


# ---------------------------------------------------------------------------
# One-time parameter preparation (hoisted out of the forward call path)
# ---------------------------------------------------------------------------
class PreparedParams(NamedTuple):
    w1: jax.Array
    b1: jax.Array
    a1: jax.Array
    w2: jax.Array
    b2: jax.Array
    a2: jax.Array
    w3: jax.Array
    b3: jax.Array
    input_dim: int
    hidden_dim: int
    output_dim: int
    in_p: int
    hid_p: int
    out_p: int


def prepare_params(params):
    """Pad & cast params once (bf16 weights, f32 biases). Cache the result."""
    w1, b1, a1, w2, b2, a2, w3, b3 = params
    input_dim, hidden_dim = w1.shape
    output_dim = w3.shape[1]

    # MXU-facing dims: 256-aligned when large (fills v6e/v7x 256-deep MXU),
    # 128 otherwise (v5e MXU / tiny dims).
    mxu_align = 256 if hidden_dim >= 256 else 128
    hid_p = _round_up(hidden_dim, mxu_align)
    out_p = _round_up(output_dim, mxu_align) if output_dim >= 256 \
        else _round_up(output_dim, 128)

    # K dim of the first matmul: skip lane padding for tiny K (loads tolerate
    # sub-128 lanes; avoids inflating x HBM traffic 8x at input_dim=16).
    if input_dim % 128 == 0 or (input_dim < 128 and input_dim % 8 == 0):
        in_p = input_dim
    else:
        in_p = _round_up(input_dim, 128)

    def pad_w(w, r, c, rp, cp):
        wb = w.astype(jnp.bfloat16)
        if (rp, cp) == (r, c):
            return wb
        return jnp.zeros((rp, cp), jnp.bfloat16).at[:r, :c].set(wb)

    def pad_b(b, c, cp):
        if cp == c:
            return b.astype(jnp.float32)
        return jnp.zeros((1, cp), jnp.float32).at[:, :c].set(b)

    w1p = pad_w(w1, input_dim, hidden_dim, in_p, hid_p)
    w2p = pad_w(w2, hidden_dim, hidden_dim, hid_p, hid_p)
    w3p = pad_w(w3, hidden_dim, output_dim, hid_p, out_p)
    b1p = pad_b(b1, hidden_dim, hid_p)
    b2p = pad_b(b2, hidden_dim, hid_p)
    b3p = pad_b(b3, output_dim, out_p)

    return PreparedParams(w1p, b1p, a1.astype(jnp.float32),
                          w2p, b2p, a2.astype(jnp.float32),
                          w3p, b3p,
                          input_dim, hidden_dim, output_dim,
                          in_p, hid_p, out_p)


# ---------------------------------------------------------------------------
# Forward
# ---------------------------------------------------------------------------
def mlp_forward(x, prepared: PreparedParams, *, batch_tile=512,
                out_dtype=jnp.float32):
    """Fused MLP forward. x: (B, input_dim) f32 -> (B, output_dim) out_dtype.
    (out_dtype=jnp.bfloat16 halves output writeback if downstream allows.)"""
    pp = prepared
    B, input_dim = x.shape
    assert input_dim == pp.input_dim
    in_p, hid_p, out_p = pp.in_p, pp.hid_p, pp.out_p

    # Batch tiling: multiple of 8 sublanes, minimal padded waste, and >=2 grid
    # steps when B allows so "parallel" can shard across v7x's 2 TensorCores.
    B8 = _round_up(max(B, 8), 8)
    n_steps = max(_cdiv(B8, batch_tile), 2 if B8 >= 16 else 1)
    TB = _round_up(_cdiv(B8, n_steps), 8)
    Bp = TB * n_steps
    grid = (n_steps,)

    # Input: cast to bf16 BEFORE padding (no padded-f32 intermediate).
    xb = x.astype(jnp.bfloat16)
    if Bp == B and in_p == input_dim:
        xp = xb
    else:
        xp = jnp.zeros((Bp, in_p), jnp.bfloat16).at[:B, :input_dim].set(xb)

    # Weights/biases: full block, constant index_map, single-buffered residency.
    def const2d(shape):
        return pl.BlockSpec(shape, lambda i: (0, 0),
                            pipeline_mode=pl.Buffered(1))

    smem = pl.BlockSpec(memory_space=pltpu.MemorySpace.SMEM)

    # --- VMEM budget (weights single-buffered, x/out tiles double-buffered) ---
    out_itemsize = jnp.dtype(out_dtype).itemsize
    resident = ((pp.w1.size + pp.w2.size + pp.w3.size) * 2
                + (pp.b1.size + pp.b2.size + pp.b3.size) * 4)
    per_step = (2 * TB * in_p * 2                 # x tile (bf16, double-buffered)
                + 2 * TB * out_p * out_itemsize   # out tile (double-buffered)
                + TB * hid_p * (4 + 2)            # f32 acc + bf16 activation
                + TB * out_p * 4)                 # final f32 acc
    budget = _vmem_budget_bytes()
    # TODO(synk): K/N-tiled fallback (extra grid axis + f32 accumulator scratch)
    #             when weights exceed VMEM residency; required for huge hidden_dim.
    assert resident <= int(0.7 * budget), (
        f"hidden_dim too large for VMEM-resident weights ({resident} B > budget)")
    vmem_limit = int(min(budget, max(2 * (resident + per_step), 32 * 1024 * 1024)))

    # Cost estimate for XLA scheduling.
    flops = 2 * Bp * (in_p * hid_p + hid_p * hid_p + hid_p * out_p)
    bytes_accessed = (xp.size * 2
                      + (pp.w1.size + pp.w2.size + pp.w3.size) * 2
                      + (pp.b1.size + pp.b2.size + pp.b3.size) * 4
                      + Bp * out_p * out_itemsize)

    out_padded = pl.pallas_call(
        partial(mlp_kernel, act_dtype=_act_dtype()),
        out_shape=jax.ShapeDtypeStruct((Bp, out_p), out_dtype),
        grid=grid,
        in_specs=[
            pl.BlockSpec((TB, in_p), lambda i: (i, 0)),            # x tile
            const2d((in_p, hid_p)), const2d((1, hid_p)), smem,     # w1, b1, alpha1
            const2d((hid_p, hid_p)), const2d((1, hid_p)), smem,    # w2, b2, alpha2
            const2d((hid_p, out_p)), const2d((1, out_p)),          # w3, b3
        ],
        out_specs=pl.BlockSpec((TB, out_p), lambda i: (i, 0)),
        compiler_params=pltpu.CompilerParams(
            dimension_semantics=("parallel",),
            vmem_limit_bytes=vmem_limit,
        ),
        cost_estimate=pl.CostEstimate(
            flops=flops, transcendentals=0, bytes_accessed=bytes_accessed),
    )(xp, pp.w1, pp.b1, pp.a1, pp.w2, pp.b2, pp.a2, pp.w3, pp.b3)

    return out_padded[:B, :pp.output_dim]


# ---------------------------------------------------------------------------
# Init / reference
# ---------------------------------------------------------------------------
def init_params(key, input_dim, hidden_dim, output_dim):
    """Deterministic init mimicking nn.Linear (U[-1/sqrt(in), 1/sqrt(in)]) and
    nn.PReLU (alpha = 0.25, single shared parameter)."""
    ks = jax.random.split(key, 6)

    def linear(kw, kb, din, dout):
        bound = 1.0 / jnp.sqrt(din)
        # stored as (in, out): transposed relative to PyTorch's (out, in)
        w = jax.random.uniform(kw, (din, dout), jnp.float32, -bound, bound)
        b = jax.random.uniform(kb, (1, dout), jnp.float32, -bound, bound)
        return w, b

    w1, b1 = linear(ks[0], ks[1], input_dim, hidden_dim)
    w2, b2 = linear(ks[2], ks[3], hidden_dim, hidden_dim)
    w3, b3 = linear(ks[4], ks[5], hidden_dim, output_dim)
    a1 = jnp.full((1,), 0.25, jnp.float32)
    a2 = jnp.full((1,), 0.25, jnp.float32)
    return (w1, b1, a1, w2, b2, a2, w3, b3)


def mlp_reference(x, params):
    w1, b1, a1, w2, b2, a2, w3, b3 = params
    h = x @ w1 + b1
    h = jnp.where(h > 0, h, a1[0] * h)
    h = h @ w2 + b2
    h = jnp.where(h > 0, h, a2[0] * h)
    return h @ w3 + b3


if __name__ == "__main__":
    batch, input_dim, hidden_dim, output_dim = 8, 16, 32, 8

    key = jax.random.PRNGKey(0)
    k_x, k_p = jax.random.split(key)
    x = jax.random.normal(k_x, (batch, input_dim), jnp.float32)
    params = init_params(k_p, input_dim, hidden_dim, output_dim)

    prepared = prepare_params(params)            # pad/cast once, reuse across calls
    out = mlp_forward(x, prepared)
    out = jax.block_until_ready(out)

    ref = mlp_reference(x, params)
    assert out.shape == (batch, output_dim)
    # bf16 matmul operands / PReLU with f32 accumulation -> relaxed tolerance.
    assert jnp.allclose(out, ref, atol=5e-2, rtol=5e-2), "mismatch vs reference"

    print("KERNEL_OK")
</pallas_src>

<mosaic_0001>
module attributes {stable_mosaic.version = 11 : i64} {
  func.func @mlp_kernel(%arg0: i32, %arg1: memref<8x16xbf16, #tpu.memory_space<vmem>>, %arg2: memref<16x128xbf16, #tpu.memory_space<vmem>>, %arg3: memref<1x128xf32, #tpu.memory_space<vmem>>, %arg4: memref<1xf32, #tpu.memory_space<smem>>, %arg5: memref<128x128xbf16, #tpu.memory_space<vmem>>, %arg6: memref<1x128xf32, #tpu.memory_space<vmem>>, %arg7: memref<1xf32, #tpu.memory_space<smem>>, %arg8: memref<128x128xbf16, #tpu.memory_space<vmem>>, %arg9: memref<1x128xf32, #tpu.memory_space<vmem>>, %arg10: memref<8x128xf32, #tpu.memory_space<vmem>>) attributes {dimension_semantics = [#tpu.dimension_semantics<parallel>], iteration_bounds = array<i64: 1>, scalar_prefetch = 0 : i64, scratch_operands = 0 : i64, tpu.core_type = #tpu.core_type<tc>, window_params = [{transform_indices = @transform_0, window_bounds = array<i64: 8, 16>}, {pipeline_mode = #tpu.pipeline_mode<synchronous>, transform_indices = @transform_1, window_bounds = array<i64: 16, 128>}, {pipeline_mode = #tpu.pipeline_mode<synchronous>, transform_indices = @transform_2, window_bounds = array<i64: 1, 128>}, {transform_indices = @transform_3, window_bounds = array<i64: 1>}, {pipeline_mode = #tpu.pipeline_mode<synchronous>, transform_indices = @transform_4, window_bounds = array<i64: 128, 128>}, {pipeline_mode = #tpu.pipeline_mode<synchronous>, transform_indices = @transform_5, window_bounds = array<i64: 1, 128>}, {transform_indices = @transform_6, window_bounds = array<i64: 1>}, {pipeline_mode = #tpu.pipeline_mode<synchronous>, transform_indices = @transform_7, window_bounds = array<i64: 128, 128>}, {pipeline_mode = #tpu.pipeline_mode<synchronous>, transform_indices = @transform_8, window_bounds = array<i64: 1, 128>}, {transform_indices = @transform_9, window_bounds = array<i64: 8, 128>}]} {
    %c0 = arith.constant 0 : index
    %0 = memref.load %arg4[%c0] : memref<1xf32, #tpu.memory_space<smem>>
    %1 = arith.truncf %0 : f32 to bf16
    %c0_0 = arith.constant 0 : index
    %2 = memref.load %arg7[%c0_0] : memref<1xf32, #tpu.memory_space<smem>>
    %3 = arith.truncf %2 : f32 to bf16
    %c0_1 = arith.constant 0 : index
    %c0_2 = arith.constant 0 : index
    %4 = vector.load %arg1[%c0_1, %c0_2] : memref<8x16xbf16, #tpu.memory_space<vmem>>, vector<8x16xbf16>
    %c0_3 = arith.constant 0 : index
    %c0_4 = arith.constant 0 : index
    %5 = vector.load %arg2[%c0_3, %c0_4] : memref<16x128xbf16, #tpu.memory_space<vmem>>, vector<16x128xbf16>
    %cst = arith.constant dense<0.000000e+00> : vector<8x128xf32>
    %6 = tpu.matmul %4, %5, %cst {dimension_numbers = #tpu.dot_dimension_numbers<[1], [0], [0], [1], [0, 0, 1, 1], [], []>} : vector<8x16xbf16>, vector<16x128xbf16>, vector<8x128xf32> -> vector<8x128xf32>
    %c0_5 = arith.constant 0 : index
    %c0_6 = arith.constant 0 : index
    %7 = vector.load %arg3[%c0_5, %c0_6] : memref<1x128xf32, #tpu.memory_space<vmem>>, vector<1x128xf32>
    %8 = vector.broadcast %7 : vector<1x128xf32> to vector<8x128xf32>
    %9 = arith.addf %6, %8 : vector<8x128xf32>
    %10 = arith.truncf %9 : vector<8x128xf32> to vector<8x128xbf16>
    %cst_7 = arith.constant 0.000000e+00 : bf16
    %11 = vector.broadcast %cst_7 : bf16 to vector<8x128xbf16>
    %12 = arith.cmpf ogt, %10, %11 : vector<8x128xbf16>
    %13 = vector.broadcast %1 : bf16 to vector<8x128xbf16>
    %14 = arith.mulf %13, %10 : vector<8x128xbf16>
    %15 = arith.select %12, %10, %14 : vector<8x128xi1>, vector<8x128xbf16>
    %c0_8 = arith.constant 0 : index
    %c0_9 = arith.constant 0 : index
    %16 = vector.load %arg5[%c0_8, %c0_9] : memref<128x128xbf16, #tpu.memory_space<vmem>>, vector<128x128xbf16>
    %cst_10 = arith.constant dense<0.000000e+00> : vector<8x128xf32>
    %17 = tpu.matmul %15, %16, %cst_10 {dimension_numbers = #tpu.dot_dimension_numbers<[1], [0], [0], [1], [0, 0, 1, 1], [], []>} : vector<8x128xbf16>, vector<128x128xbf16>, vector<8x128xf32> -> vector<8x128xf32>
    %c0_11 = arith.constant 0 : index
    %c0_12 = arith.constant 0 : index
    %18 = vector.load %arg6[%c0_11, %c0_12] : memref<1x128xf32, #tpu.memory_space<vmem>>, vector<1x128xf32>
    %19 = vector.broadcast %18 : vector<1x128xf32> to vector<8x128xf32>
    %20 = arith.addf %17, %19 : vector<8x128xf32>
    %21 = arith.truncf %20 : vector<8x128xf32> to vector<8x128xbf16>
    %cst_13 = arith.constant 0.000000e+00 : bf16
    %22 = vector.broadcast %cst_13 : bf16 to vector<8x128xbf16>
    %23 = arith.cmpf ogt, %21, %22 : vector<8x128xbf16>
    %24 = vector.broadcast %3 : bf16 to vector<8x128xbf16>
    %25 = arith.mulf %24, %21 : vector<8x128xbf16>
    %26 = arith.select %23, %21, %25 : vector<8x128xi1>, vector<8x128xbf16>
    %c0_14 = arith.constant 0 : index
    %c0_15 = arith.constant 0 : index
    %27 = vector.load %arg8[%c0_14, %c0_15] : memref<128x128xbf16, #tpu.memory_space<vmem>>, vector<128x128xbf16>
    %cst_16 = arith.constant dense<0.000000e+00> : vector<8x128xf32>
    %28 = tpu.matmul %26, %27, %cst_16 {dimension_numbers = #tpu.dot_dimension_numbers<[1], [0], [0], [1], [0, 0, 1, 1], [], []>} : vector<8x128xbf16>, vector<128x128xbf16>, vector<8x128xf32> -> vector<8x128xf32>
    %c0_17 = arith.constant 0 : index
    %c0_18 = arith.constant 0 : index
    %29 = vector.load %arg9[%c0_17, %c0_18] : memref<1x128xf32, #tpu.memory_space<vmem>>, vector<1x128xf32>
    %30 = vector.broadcast %29 : vector<1x128xf32> to vector<8x128xf32>
    %31 = arith.addf %28, %30 : vector<8x128xf32>
    %c0_19 = arith.constant 0 : index
    %c0_20 = arith.constant 0 : index
    %32 = vector.load %arg10[%c0_19, %c0_20] : memref<8x128xf32, #tpu.memory_space<vmem>>, vector<8x128xf32>
    tpu.vector_store %arg10[%c0_19, %c0_20], %31 {strides = array<i32>} : memref<8x128xf32, #tpu.memory_space<vmem>>, vector<8x128xf32>,
    return
  }
  func.func @transform_0(%arg0: i32) -> (i32, i32) {
    %c0_i32 = arith.constant 0 : i32
    %c0_i32_0 = arith.constant 0 : i32
    return %arg0, %c0_i32 : i32, i32
  }
  func.func @transform_1(%arg0: i32) -> (i32, i32) {
    %c0_i32 = arith.constant 0 : i32
    %c0_i32_0 = arith.constant 0 : i32
    %c0_i32_1 = arith.constant 0 : i32
    return %c0_i32, %c0_i32_0 : i32, i32
  }
  func.func @transform_2(%arg0: i32) -> (i32, i32) {
    %c0_i32 = arith.constant 0 : i32
    %c0_i32_0 = arith.constant 0 : i32
    %c0_i32_1 = arith.constant 0 : i32
    return %c0_i32, %c0_i32_0 : i32, i32
  }
  func.func @transform_3(%arg0: i32) -> i32 {
    %c0_i32 = arith.constant 0 : i32
    %c0_i32_0 = arith.constant 0 : i32
    return %c0_i32 : i32
  }
  func.func @transform_4(%arg0: i32) -> (i32, i32) {
    %c0_i32 = arith.constant 0 : i32
    %c0_i32_0 = arith.constant 0 : i32
    %c0_i32_1 = arith.constant 0 : i32
    return %c0_i32, %c0_i32_0 : i32, i32
  }
  func.func @transform_5(%arg0: i32) -> (i32, i32) {
    %c0_i32 = arith.constant 0 : i32
    %c0_i32_0 = arith.constant 0 : i32
    %c0_i32_1 = arith.constant 0 : i32
    return %c0_i32, %c0_i32_0 : i32, i32
  }
  func.func @transform_6(%arg0: i32) -> i32 {
    %c0_i32 = arith.constant 0 : i32
    %c0_i32_0 = arith.constant 0 : i32
    return %c0_i32 : i32
  }
  func.func @transform_7(%arg0: i32) -> (i32, i32) {
    %c0_i32 = arith.constant 0 : i32
    %c0_i32_0 = arith.constant 0 : i32
    %c0_i32_1 = arith.constant 0 : i32
    return %c0_i32, %c0_i32_0 : i32, i32
  }
  func.func @transform_8(%arg0: i32) -> (i32, i32) {
    %c0_i32 = arith.constant 0 : i32
    %c0_i32_0 = arith.constant 0 : i32
    %c0_i32_1 = arith.constant 0 : i32
    return %c0_i32, %c0_i32_0 : i32, i32
  }
  func.func @transform_9(%arg0: i32) -> (i32, i32) {
    %c0_i32 = arith.constant 0 : i32
    %c0_i32_0 = arith.constant 0 : i32
    return %arg0, %c0_i32 : i32, i32
  }
}

</mosaic_0001>

<llo_original>
// kernel: tpu_custom_call.1
$region0: #{tpu_custom_call.1}
  #allocation0 [shape = 'u32[]', space=smem, size = 0x4, offset = 0x4, fixed_abs, tag = 'smem constant byte address 0x4 - core index']
  #allocation1 [shape = 'u32[144,128]{1,0:T(1,128)}', space=vmem, size = 0x12000, scoped, tag = 'internal scratch']
  #allocation2 [shape = 'f32[1]{0:T(128)S(6)}', space=smem, size = 0x200, scoped, tag = 'scoped memory for tpu_custom_call.1']
  #allocation3 [shape = 'f32[1]{0:T(128)S(6)}', space=smem, size = 0x200, scoped, tag = 'scoped memory for tpu_custom_call.1']
  %s0 = inlined_call_operand.hbm [shape: bf16[8,16], index: 0, kind: input, shape index: {}]
  %s1 = inlined_call_operand.vmem [shape: bf16[16,128], index: 1, kind: input, shape index: {}]
  %s2 = inlined_call_operand.vmem [shape: f32[1,128], index: 2, kind: input, shape index: {}]
  %s3 = inlined_call_operand.<no memory space> [shape: f32[1], index: 3, kind: input, shape index: {}]
  %s4 = inlined_call_operand.hbm [shape: bf16[128,128], index: 4, kind: input, shape index: {}]
  %s5 = inlined_call_operand.vmem [shape: f32[1,128], index: 5, kind: input, shape index: {}]
  %s6 = inlined_call_operand.<no memory space> [shape: f32[1], index: 6, kind: input, shape index: {}]
  %s7 = inlined_call_operand.hbm [shape: bf16[128,128], index: 7, kind: input, shape index: {}]
  %s8 = inlined_call_operand.vmem [shape: f32[1,128], index: 8, kind: input, shape index: {}]
  %s9 = inlined_call_operand.hbm [shape: f32[8,128], index: 9, kind: output, shape index: {}]
  %s10 = sld [smem:[#allocation0]]
  $region58: #{tpu_custom_call.1} parent=0
    _
  %s12 = ssub.s32 1, %s10
  %s13 = scalar_select 0, %s12, %s10
  %14 = sst [smem:[#allocation2]] %s3
  %15 = sst [smem:[#allocation3]] %s6
  $region1: #{tpu_custom_call.1} parent=0
    #allocation4 [shape = 'u8[2048]{0}', space=vmem, size = 0x800, scoped, tag = 'input window, operand 0, single buffered']
    #allocation5 [shape = 's32[1]{0}', space=sflag, size = 0x4, scoped, tag = 'scoped memory for tpu_custom_call.1']
    #allocation6 [shape = 's32[1]{0}', space=sflag, size = 0x4, scoped, tag = 'scoped memory for tpu_custom_call.1']
    #allocation7 [shape = 'u8[32768]{0}', space=vmem, size = 0x8000, scoped, tag = 'input window, operand 4, single buffered']
    #allocation8 [shape = 's32[1]{0}', space=sflag, size = 0x4, scoped, tag = 'scoped memory for tpu_custom_call.1']
    #allocation9 [shape = 'u8[32768]{0}', space=vmem, size = 0x8000, scoped, tag = 'input window, operand 7, single buffered']
    #allocation10 [shape = 'u8[4096]{0}', space=vmem, size = 0x1000, scoped, tag = 'output window, operand 0, single buffered']
    %16 = vsyncpa [#allocation5], 0
    %17 = vsyncpa [#allocation8], 0
    %18 = vsyncpa [#allocation6], 0
    // Predicated region
    $region2: #{tpu_custom_call.1} parent=1 // pred_check
      _
    $region3: #{tpu_custom_call.1} parent=1 // pred_check_branch
      %20 = sbr.rel (0) target = $region5
    $region4: #{tpu_custom_call.1} parent=1 // pred_region
      %s22 = ssub.s32 64, 64
      %23 = vsyncadd [#allocation5], %s22
      %s25 = sshll.u32 [#allocation4], 4
      %s26 = int_to_ptr.vmem [resolvable:$true] %s25
      %28 = dma.hbm_to_vmem [thread:$0]  %s0, 64, %s26, [#allocation5]
    $region5: #{tpu_custom_call.1} parent=1 // pred_fallthru
      _
    // Predicated region
    $region6: #{tpu_custom_call.1} parent=1 // pred_check
      _
    $region7: #{tpu_custom_call.1} parent=1 // pred_check_branch
      %30 = sbr.rel (0) target = $region9
    $region8: #{tpu_custom_call.1} parent=1 // pred_region
      _
    $region9: #{tpu_custom_call.1} parent=1 // pred_fallthru
      _
    // Predicated region
    $region10: #{tpu_custom_call.1} parent=1 // pred_check
      _
    $region11: #{tpu_custom_call.1} parent=1 // pred_check_branch
      %32 = sbr.rel (0) target = $region13
    $region12: #{tpu_custom_call.1} parent=1 // pred_region
      _
    $region13: #{tpu_custom_call.1} parent=1 // pred_fallthru
      _
    // Predicated region
    $region14: #{tpu_custom_call.1} parent=1 // pred_check
      _
    $region15: #{tpu_custom_call.1} parent=1 // pred_check_branch
      %34 = sbr.rel (0) target = $region17
    $region16: #{tpu_custom_call.1} parent=1 // pred_region
      _
    $region17: #{tpu_custom_call.1} parent=1 // pred_fallthru
      _
    // Predicated region
    $region18: #{tpu_custom_call.1} parent=1 // pred_check
      _
    $region19: #{tpu_custom_call.1} parent=1 // pred_check_branch
      %36 = sbr.rel (0) target = $region21
    $region20: #{tpu_custom_call.1} parent=1 // pred_region
      %s38 = ssub.s32 1024, 1024
      %39 = vsyncadd [#allocation8], %s38
      %s40 = sshll.u32 [#allocation7], 4
      %s41 = int_to_ptr.vmem [resolvable:$true] %s40
      %46 = dma.hbm_to_vmem [thread:$0]  %s4, 1024, %s41, [#allocation8], 64, 64, 4
    $region21: #{tpu_custom_call.1} parent=1 // pred_fallthru
      _
    // Predicated region
    $region22: #{tpu_custom_call.1} parent=1 // pred_check
      _
    $region23: #{tpu_custom_call.1} parent=1 // pred_check_branch
      %48 = sbr.rel (0) target = $region25
    $region24: #{tpu_custom_call.1} parent=1 // pred_region
      _
    $region25: #{tpu_custom_call.1} parent=1 // pred_fallthru
      _
    // Predicated region
    $region26: #{tpu_custom_call.1} parent=1 // pred_check
      _
    $region27: #{tpu_custom_call.1} parent=1 // pred_check_branch
      %50 = sbr.rel (0) target = $region29
    $region28: #{tpu_custom_call.1} parent=1 // pred_region
      _
    $region29: #{tpu_custom_call.1} parent=1 // pred_fallthru
      _
    // Predicated region
    $region30: #{tpu_custom_call.1} parent=1 // pred_check
      _
    $region31: #{tpu_custom_call.1} parent=1 // pred_check_branch
      %52 = sbr.rel (0) target = $region33
    $region32: #{tpu_custom_call.1} parent=1 // pred_region
      %s54 = ssub.s32 1024, 1024
      %55 = vsyncadd [#allocation8], %s54
      %s56 = sshll.u32 [#allocation9], 4
      %s57 = int_to_ptr.vmem [resolvable:$true] %s56
      %62 = dma.hbm_to_vmem [thread:$0]  %s7, 1024, %s57, [#allocation8], 64, 64, 4
    $region33: #{tpu_custom_call.1} parent=1 // pred_fallthru
      _
    // Predicated region
    $region34: #{tpu_custom_call.1} parent=1 // pred_check
      _
    $region35: #{tpu_custom_call.1} parent=1 // pred_check_branch
      %64 = sbr.rel (0) target = $region37
    $region36: #{tpu_custom_call.1} parent=1 // pred_region
      _
    $region37: #{tpu_custom_call.1} parent=1 // pred_fallthru
      _
    // Predicated region
    $region38: #{tpu_custom_call.1} parent=1 // pred_check
      _
    $region39: #{tpu_custom_call.1} parent=1 // pred_check_branch
      %66 = sbr.rel (0) target = $region41
    $region40: #{tpu_custom_call.1} parent=1 // pred_region
      %67 = dma.done [#allocation5], 64
    $region41: #{tpu_custom_call.1} parent=1 // pred_fallthru
      _
    // Predicated region
    $region42: #{tpu_custom_call.1} parent=1 // pred_check
      _
    $region43: #{tpu_custom_call.1} parent=1 // pred_check_branch
      %69 = sbr.rel (0) target = $region45
    $region44: #{tpu_custom_call.1} parent=1 // pred_region
      %70 = dma.done [#allocation8], 1024
    $region45: #{tpu_custom_call.1} parent=1 // pred_fallthru
      _
    // Predicated region
    $region46: #{tpu_custom_call.1} parent=1 // pred_check
      _
    $region47: #{tpu_custom_call.1} parent=1 // pred_check_branch
      %72 = sbr.rel (0) target = $region49
    $region48: #{tpu_custom_call.1} parent=1 // pred_region
      %73 = dma.done [#allocation8], 1024
    $region49: #{tpu_custom_call.1} parent=1 // pred_fallthru
      _
    %s75 = sld [smem:[#allocation2]]
    %p77 = scmp.ne.f32.partialorder %s75, %s75
    %s78 = sshrl.u32 %s75, 16
    %s79 = sand.u32 %s78, 1
    %s80 = sadd.s32 32767, %s79
    %s81 = sadd.s32 %s75, %s80
    %s82 = sand.u32 %s81, 4294901760
    %s83 = scalar_select %p77, 2143289344, %s82
    %s85 = sshrl.u32 %s83, 16
    %s86 = sld [smem:[#allocation3]]
    %p88 = scmp.ne.f32.partialorder %s86, %s86
    %s89 = sshrl.u32 %s86, 16
    %s90 = sand.u32 %s89, 1
    %s91 = sadd.s32 32767, %s90
    %s92 = sadd.s32 %s86, %s91
    %s93 = sand.u32 %s92, 4294901760
    %s94 = scalar_select %p88, 2143289344, %s93
    %s96 = sshrl.u32 %s94, 16
    %v97 = vld [vmem:[#allocation4] sm:$0xf]
    %v98 = vld [vmem:[%s1] sm:$0xf]
    %v99 = vld [vmem:[%s1 + $0x4] sm:$0xf]
    %v100 = vld [vmem:[%s2] sm:$0x1]
    %v102 = vlaneseq
    %v103 = vshrl.u32 %v102, 7
    %v104 = vsub.s32 0, %v103
    %v105 = vrot.slane %v100, %v104
    %v109 = vunpack.c.l.b16 %v98
    %v110 = vunpack.c.l.b16 %v99
    %v111 = vpack.c.b16 %v110, %v109
    %vm113 = vcmask 130048
    %v115 = vsel %vm113, %v97, 0
    %117 = vmatprep.subr.bf16.mxu0 0
    %118 = vmatpush1.bf16.msra.mxu0 %v111
    %119 = vmatprep.subr.bf16.mxu0 0
    %120 = vmatpush1.bf16.msra.mxu0 0
    %121 = vmatprep.subr.bf16.mxu0 0
    %122 = vmatpush1.bf16.msra.mxu0 0
    %123 = vmatprep.subr.bf16.mxu0 0
    %124 = vmatpush1.bf16.msra.mxu0 0
    %125 = vmatprep.subr.bf16.mxu0 0
    %126 = vmatpush1.bf16.msra.mxu0 0
    %127 = vmatprep.subr.bf16.mxu0 0
    %128 = vmatpush1.bf16.msra.mxu0 0
    %129 = vmatprep.subr.bf16.mxu0 0
    %130 = vmatpush1.bf16.msra.mxu0 0
    %131 = vmatprep.subr.bf16.mxu0 0
    %132 = vmatpush1.bf16.msra.mxu0 0
    %133 = vmatprep.subr.bf16.mxu0 0
    %134 = vmatpush1.bf16.msra.mxu0 0
    %135 = vmatprep.subr.bf16.mxu0 0
    %136 = vmatpush1.bf16.msra.mxu0 0
    %137 = vmatprep.subr.bf16.mxu0 0
    %138 = vmatpush1.bf16.msra.mxu0 0
    %139 = vmatprep.subr.bf16.mxu0 0
    %140 = vmatpush1.bf16.msra.mxu0 0
    %141 = vmatprep.subr.bf16.mxu0 0
    %142 = vmatpush1.bf16.msra.mxu0 0
    %143 = vmatprep.subr.bf16.mxu0 0
    %144 = vmatpush1.bf16.msra.mxu0 0
    %145 = vmatprep.subr.bf16.mxu0 0
    %146 = vmatpush1.bf16.msra.mxu0 0
    %147 = vmatprep.subr.bf16.mxu0 0
    %148 = vmatpush1.bf16.msra.mxu0 0
    %149 = vmatprep.mubr.bf16.mxu0 0
    %150 = vmatmul.mubr.bf16.gmra.mrb[0].mxu0 %v115
    %v151 = vpop.f32.mrb[0].mxu0
    %v152 = vadd.f32 %v105, %v151
    %v153 = vpop.f32.mrb[0].mxu0
    %v154 = vpop.f32.mrb[0].mxu0
    %v155 = vpop.f32.mrb[0].mxu0
    %156 = vdwg.mxu0
    %v157 = vpack.c.bf16 %v152, %v152
    %vm158 = vcmp.gt.bf16.partialorder %v157, 0
    %s159 = sshll.u32 %s85, 16
    %s160 = sor.u32 %s85, %s159
    %v161 = vstv %s160
    %v163 = vmul.bf16 %v161, %v157
    %v164 = vsel %vm158, %v157, %v163
    %v165 = vld [vmem:[#allocation7] sm:$0xf]
    %v166 = vld [vmem:[#allocation7 + $0x4] sm:$0xf]
    %v167 = vld [vmem:[#allocation7 + $0x8] sm:$0xf]
    %v168 = vld [vmem:[#allocation7 + $0xc] sm:$0xf]
    %v169 = vld [vmem:[#allocation7 + $0x10] sm:$0xf]
    %v170 = vld [vmem:[#allocation7 + $0x14] sm:$0xf]
    %v171 = vld [vmem:[#allocation7 + $0x18] sm:$0xf]
    %v172 = vld [vmem:[#allocation7 + $0x1c] sm:$0xf]
    %v173 = vld [vmem:[#allocation7 + $0x20] sm:$0xf]
    %v174 = vld [vmem:[#allocation7 + $0x24] sm:$0xf]
    %v175 = vld [vmem:[#allocation7 + $0x28] sm:$0xf]
    %v176 = vld [vmem:[#allocation7 + $0x2c] sm:$0xf]
    %v177 = vld [vmem:[#allocation7 + $0x30] sm:$0xf]
    %v178 = vld [vmem:[#allocation7 + $0x34] sm:$0xf]
    %v179 = vld [vmem:[#allocation7 + $0x38] sm:$0xf]
    %v180 = vld [vmem:[#allocation7 + $0x3c] sm:$0xf]
    %v181 = vld [vmem:[%s5] sm:$0x1]
    %v183 = vlaneseq
    %v184 = vshrl.u32 %v183, 7
    %v185 = vsub.s32 0, %v184
    %v186 = vrot.slane %v181, %v185
    %v204 = vunpack.c.l.b16 %v165
    %v205 = vunpack.c.l.b16 %v166
    %v206 = vunpack.c.l.b16 %v167
    %v207 = vunpack.c.l.b16 %v168
    %v208 = vunpack.c.l.b16 %v169
    %v209 = vunpack.c.l.b16 %v170
    %v210 = vunpack.c.l.b16 %v171
    %v211 = vunpack.c.l.b16 %v172
    %v212 = vunpack.c.l.b16 %v173
    %v213 = vunpack.c.l.b16 %v174
    %v214 = vunpack.c.l.b16 %v175
    %v215 = vunpack.c.l.b16 %v176
    %v216 = vunpack.c.l.b16 %v177
    %v217 = vunpack.c.l.b16 %v178
    %v218 = vunpack.c.l.b16 %v179
    %v219 = vunpack.c.l.b16 %v180
    %v220 = vpack.c.b16 %v205, %v204
    %v221 = vpack.c.b16 %v207, %v206
    %v222 = vpack.c.b16 %v209, %v208
    %v223 = vpack.c.b16 %v211, %v210
    %v224 = vpack.c.b16 %v213, %v212
    %v225 = vpack.c.b16 %v215, %v214
    %v226 = vpack.c.b16 %v217, %v216
    %v227 = vpack.c.b16 %v219, %v218
    %236 = vmatprep.subr.bf16.mxu0 0
    %237 = vmatpush1.bf16.msra.mxu0 %v220
    %238 = vmatprep.subr.bf16.mxu0 0
    %239 = vmatpush1.bf16.msra.mxu0 %v221
    %240 = vmatprep.subr.bf16.mxu0 0
    %241 = vmatpush1.bf16.msra.mxu0 %v222
    %242 = vmatprep.subr.bf16.mxu0 0
    %243 = vmatpush1.bf16.msra.mxu0 %v223
    %244 = vmatprep.subr.bf16.mxu0 0
    %245 = vmatpush1.bf16.msra.mxu0 %v224
    %246 = vmatprep.subr.bf16.mxu0 0
    %247 = vmatpush1.bf16.msra.mxu0 %v225
    %248 = vmatprep.subr.bf16.mxu0 0
    %249 = vmatpush1.bf16.msra.mxu0 %v226
    %250 = vmatprep.subr.bf16.mxu0 0
    %251 = vmatpush1.bf16.msra.mxu0 %v227
    %252 = vmatprep.subr.bf16.mxu0 0
    %253 = vmatpush1.bf16.msra.mxu0 0
    %254 = vmatprep.subr.bf16.mxu0 0
    %255 = vmatpush1.bf16.msra.mxu0 0
    %256 = vmatprep.subr.bf16.mxu0 0
    %257 = vmatpush1.bf16.msra.mxu0 0
    %258 = vmatprep.subr.bf16.mxu0 0
    %259 = vmatpush1.bf16.msra.mxu0 0
    %260 = vmatprep.subr.bf16.mxu0 0
    %261 = vmatpush1.bf16.msra.mxu0 0
    %262 = vmatprep.subr.bf16.mxu0 0
    %263 = vmatpush1.bf16.msra.mxu0 0
    %264 = vmatprep.subr.bf16.mxu0 0
    %265 = vmatpush1.bf16.msra.mxu0 0
    %266 = vmatprep.subr.bf16.mxu0 0
    %267 = vmatpush1.bf16.msra.mxu0 0
    %268 = vmatprep.mubr.bf16.mxu0 0
    %269 = vmatmul.mubr.bf16.gmra.mrb[0].mxu0 %v164
    %v270 = vpop.f32.mrb[0].mxu0
    %v271 = vadd.f32 %v186, %v270
    %v272 = vpop.f32.mrb[0].mxu0
    %v273 = vpop.f32.mrb[0].mxu0
    %v274 = vpop.f32.mrb[0].mxu0
    %275 = vdwg.mxu0
    %v276 = vpack.c.bf16 %v271, %v271
    %vm277 = vcmp.gt.bf16.partialorder %v276, 0
    %s278 = sshll.u32 %s96, 16
    %s279 = sor.u32 %s96, %s278
    %v280 = vstv %s279
    %v282 = vmul.bf16 %v280, %v276
    %v283 = vsel %vm277, %v276, %v282
    %v284 = vld [vmem:[#allocation9] sm:$0xf]
    %v285 = vld [vmem:[#allocation9 + $0x4] sm:$0xf]
    %v286 = vld [vmem:[#allocation9 + $0x8] sm:$0xf]
    %v287 = vld [vmem:[#allocation9 + $0xc] sm:$0xf]
    %v288 = vld [vmem:[#allocation9 + $0x10] sm:$0xf]
    %v289 = vld [vmem:[#allocation9 + $0x14] sm:$0xf]
    %v290 = vld [vmem:[#allocation9 + $0x18] sm:$0xf]
    %v291 = vld [vmem:[#allocation9 + $0x1c] sm:$0xf]
    %v292 = vld [vmem:[#allocation9 + $0x20] sm:$0xf]
    %v293 = vld [vmem:[#allocation9 + $0x24] sm:$0xf]
    %v294 = vld [vmem:[#allocation9 + $0x28] sm:$0xf]
    %v295 = vld [vmem:[#allocation9 + $0x2c] sm:$0xf]
    %v296 = vld [vmem:[#allocation9 + $0x30] sm:$0xf]
    %v297 = vld [vmem:[#allocation9 + $0x34] sm:$0xf]
    %v298 = vld [vmem:[#allocation9 + $0x38] sm:$0xf]
    %v299 = vld [vmem:[#allocation9 + $0x3c] sm:$0xf]
    %v300 = vld [vmem:[%s8] sm:$0x1]
    %v302 = vlaneseq
    %v303 = vshrl.u32 %v302, 7
    %v304 = vsub.s32 0, %v303
    %v305 = vrot.slane %v300, %v304
    %v323 = vunpack.c.l.b16 %v284
    %v324 = vunpack.c.l.b16 %v285
    %v325 = vunpack.c.l.b16 %v286
    %v326 = vunpack.c.l.b16 %v287
    %v327 = vunpack.c.l.b16 %v288
    %v328 = vunpack.c.l.b16 %v289
    %v329 = vunpack.c.l.b16 %v290
    %v330 = vunpack.c.l.b16 %v291
    %v331 = vunpack.c.l.b16 %v292
    %v332 = vunpack.c.l.b16 %v293
    %v333 = vunpack.c.l.b16 %v294
    %v334 = vunpack.c.l.b16 %v295
    %v335 = vunpack.c.l.b16 %v296
    %v336 = vunpack.c.l.b16 %v297
    %v337 = vunpack.c.l.b16 %v298
    %v338 = vunpack.c.l.b16 %v299
    %v339 = vpack.c.b16 %v324, %v323
    %v340 = vpack.c.b16 %v326, %v325
    %v341 = vpack.c.b16 %v328, %v327
    %v342 = vpack.c.b16 %v330, %v329
    %v343 = vpack.c.b16 %v332, %v331
    %v344 = vpack.c.b16 %v334, %v333
    %v345 = vpack.c.b16 %v336, %v335
    %v346 = vpack.c.b16 %v338, %v337
    %355 = vmatprep.subr.bf16.mxu0 0
    %356 = vmatpush1.bf16.msra.mxu0 %v339
    %357 = vmatprep.subr.bf16.mxu0 0
    %358 = vmatpush1.bf16.msra.mxu0 %v340
    %359 = vmatprep.subr.bf16.mxu0 0
    %360 = vmatpush1.bf16.msra.mxu0 %v341
    %361 = vmatprep.subr.bf16.mxu0 0
    %362 = vmatpush1.bf16.msra.mxu0 %v342
    %363 = vmatprep.subr.bf16.mxu0 0
    %364 = vmatpush1.bf16.msra.mxu0 %v343
    %365 = vmatprep.subr.bf16.mxu0 0
    %366 = vmatpush1.bf16.msra.mxu0 %v344
    %367 = vmatprep.subr.bf16.mxu0 0
    %368 = vmatpush1.bf16.msra.mxu0 %v345
    %369 = vmatprep.subr.bf16.mxu0 0
    %370 = vmatpush1.bf16.msra.mxu0 %v346
    %371 = vmatprep.subr.bf16.mxu0 0
    %372 = vmatpush1.bf16.msra.mxu0 0
    %373 = vmatprep.subr.bf16.mxu0 0
    %374 = vmatpush1.bf16.msra.mxu0 0
    %375 = vmatprep.subr.bf16.mxu0 0
    %376 = vmatpush1.bf16.msra.mxu0 0
    %377 = vmatprep.subr.bf16.mxu0 0
    %378 = vmatpush1.bf16.msra.mxu0 0
    %379 = vmatprep.subr.bf16.mxu0 0
    %380 = vmatpush1.bf16.msra.mxu0 0
    %381 = vmatprep.subr.bf16.mxu0 0
    %382 = vmatpush1.bf16.msra.mxu0 0
    %383 = vmatprep.subr.bf16.mxu0 0
    %384 = vmatpush1.bf16.msra.mxu0 0
    %385 = vmatprep.subr.bf16.mxu0 0
    %386 = vmatpush1.bf16.msra.mxu0 0
    %387 = vmatprep.mubr.bf16.mxu0 0
    %388 = vmatmul.mubr.bf16.gmra.mrb[0].mxu0 %v283
    %v389 = vpop.f32.mrb[0].mxu0
    %v390 = vadd.f32 %v305, %v389
    %v391 = vpop.f32.mrb[0].mxu0
    %v392 = vpop.f32.mrb[0].mxu0
    %v393 = vpop.f32.mrb[0].mxu0
    %394 = vdwg.mxu0
    %395 = vst [vmem:[#allocation10] sm:$0xff] %v390
    // Predicated region
    $region50: #{tpu_custom_call.1} parent=1 // pred_check
      _
    $region51: #{tpu_custom_call.1} parent=1 // pred_check_branch
      %397 = sbr.rel (0) target = $region53
    $region52: #{tpu_custom_call.1} parent=1 // pred_region
      %s399 = ssub.s32 128, 128
      %400 = vsyncadd [#allocation6], %s399
      %s402 = sshll.u32 [#allocation10], 4
      %s403 = int_to_ptr.vmem [resolvable:$true] %s402
      %405 = dma.vmem_to_hbm [thread:$0]  %s403, 128, %s9, [#allocation6]
    $region53: #{tpu_custom_call.1} parent=1 // pred_fallthru
      _
    // Predicated region
    $region54: #{tpu_custom_call.1} parent=1 // pred_check
      _
    $region55: #{tpu_custom_call.1} parent=1 // pred_check_branch
      %407 = sbr.rel (0) target = $region57
    $region56: #{tpu_custom_call.1} parent=1 // pred_region
      %408 = dma.done [#allocation6], 128
    $region57: #{tpu_custom_call.1} parent=1 // pred_fallthru
      _
    %409 = vsyncpa [#allocation5], 1
    %410 = vsyncpa [#allocation8], 1
    %411 = vsyncpa [#allocation6], 1

</llo_original>
